<compile_context>
chip_gen: v5e
topology: v5e:2x2
jax: 0.10.0
libtpu: 0.0.40
codegen_flags: <defaults>
</compile_context>

<pallas_src>
import functools

import jax
import jax.numpy as jnp
from jax.experimental import pallas as pl
from jax.experimental.pallas import tpu as pltpu


def _round_up(n, m):
    return (n + m - 1) // m * m


def _sigmoid(v):
    # One EUP tanh instead of exp + divide (cheaper on the serial chain).
    return 0.5 * jnp.tanh(0.5 * v) + 0.5


def _lstm_classifier_kernel(x_ref, wih_ref, whh_ref, b_ref, wfc_ref, bfc_ref,
                            out_ref, h_ref, c_ref, *, seq_len):
    """One (batch_tile, time_chunk) grid step of the LSTM recurrence.

    x_ref   : (TC*BT, D)  bf16   this chunk's inputs, time-major within chunk
    wih_ref : (D,  Gp)    bf16   gate columns [i|f|g|o], each width H
    whh_ref : (H,  Gp)    bf16
    b_ref   : (1,  Gp)    f32    b_ih + b_hh (zero in padded lanes)
    wfc_ref : (H,  Op)    bf16
    bfc_ref : (1,  Op)    f32
    out_ref : (BT, Op)    f32    lane-dense logits (written at last chunk)
    h_ref/c_ref : (BT, H) f32    VMEM scratch carrying state across chunks
    """
    t_chunk = pl.program_id(1)
    num_chunks = pl.num_programs(1)

    BT, H = h_ref.shape
    TC = x_ref.shape[0] // BT

    @pl.when(t_chunk == 0)
    def _():
        h_ref[...] = jnp.zeros_like(h_ref)
        c_ref[...] = jnp.zeros_like(c_ref)

    # Hoisted input projection: ONE MXU matmul over all TC timesteps of this
    # chunk; only the recurrent h @ W_hh matmul stays on the serial chain.
    xp = (jnp.dot(x_ref[...], wih_ref[...],
                  preferred_element_type=jnp.float32) + b_ref[...])  # (TC*BT, Gp) f32

    whh = whh_ref[...]
    h = h_ref[...]
    c = c_ref[...]

    rem = seq_len % TC  # static: nonzero only if the last chunk is partial

    # Short fixed trip count per chunk: fully unroll so the LLO scheduler can
    # overlap across steps.
    for s in range(TC):
        gates = xp[s * BT:(s + 1) * BT, :] + jnp.dot(
            h.astype(jnp.bfloat16), whh, preferred_element_type=jnp.float32)
        i = _sigmoid(gates[:, 0 * H:1 * H])
        f = _sigmoid(gates[:, 1 * H:2 * H])
        g = jnp.tanh(gates[:, 2 * H:3 * H])
        o = _sigmoid(gates[:, 3 * H:4 * H])
        c_new = f * c + i * g
        h_new = o * jnp.tanh(c_new)
        if rem and s >= rem:
            # Only the last time chunk may contain padded timesteps: freeze
            # the state for those (padded inputs must not advance the LSTM).
            keep = t_chunk < num_chunks - 1
            h = jnp.where(keep, h_new, h)
            c = jnp.where(keep, c_new, c)
        else:
            h, c = h_new, c_new

    h_ref[...] = h
    c_ref[...] = c

    @pl.when(t_chunk == num_chunks - 1)
    def _():
        out_ref[...] = (jnp.dot(h.astype(jnp.bfloat16), wfc_ref[...],
                                preferred_element_type=jnp.float32)
                        + bfc_ref[...])


def init_params(key, input_size, hidden_size, output_size):
    """PyTorch-default-style init: U(-1/sqrt(H), 1/sqrt(H)) for LSTM & Linear."""
    ks = jax.random.split(key, 6)
    k_lstm = 1.0 / jnp.sqrt(hidden_size)
    w_ih = jax.random.uniform(ks[0], (4 * hidden_size, input_size),
                              jnp.float32, -k_lstm, k_lstm)
    w_hh = jax.random.uniform(ks[1], (4 * hidden_size, hidden_size),
                              jnp.float32, -k_lstm, k_lstm)
    b_ih = jax.random.uniform(ks[2], (4 * hidden_size,), jnp.float32, -k_lstm, k_lstm)
    b_hh = jax.random.uniform(ks[3], (4 * hidden_size,), jnp.float32, -k_lstm, k_lstm)
    k_fc = 1.0 / jnp.sqrt(hidden_size)
    w_fc = jax.random.uniform(ks[4], (output_size, hidden_size),
                              jnp.float32, -k_fc, k_fc)
    b_fc = jax.random.uniform(ks[5], (output_size,), jnp.float32, -k_fc, k_fc)
    return dict(w_ih=w_ih, w_hh=w_hh, b_ih=b_ih, b_hh=b_hh, w_fc=w_fc, b_fc=b_fc)


def prepare_params(params):
    """One-time repack: PyTorch row-blocked [i|f|g|o] weights -> transposed,
    combined-gate-dim-padded, bf16 layouts the kernel consumes."""
    f32, bf16 = jnp.float32, jnp.bfloat16
    w_ih = jnp.asarray(params["w_ih"], f32)               # (4H, D)
    w_hh = jnp.asarray(params["w_hh"], f32)               # (4H, H)
    b_sum = jnp.asarray(params["b_ih"] + params["b_hh"], f32)
    w_fc = jnp.asarray(params["w_fc"], f32)               # (O, H)
    b_fc = jnp.asarray(params["b_fc"], f32)                # (O,)

    four_h, D = w_ih.shape
    H = w_hh.shape[1]
    O = w_fc.shape[0]
    Gp = _round_up(four_h, 128)   # pad the COMBINED gate dim (not per gate)
    Op = _round_up(O, 128)        # lane-dense FC output

    wih_p = jnp.zeros((D, Gp), f32).at[:, :four_h].set(w_ih.T)
    whh_p = jnp.zeros((H, Gp), f32).at[:, :four_h].set(w_hh.T)
    b_p = jnp.zeros((1, Gp), f32).at[0, :four_h].set(b_sum)
    wfc_p = jnp.zeros((H, Op), f32).at[:, :O].set(w_fc.T)
    bfc_p = jnp.zeros((1, Op), f32).at[0, :O].set(b_fc)

    return {
        "wih": wih_p.astype(bf16),
        "whh": whh_p.astype(bf16),
        "b": b_p,
        "wfc": wfc_p.astype(bf16),
        "bfc": bfc_p,
        "out_features": O,        # python int, static
    }


@functools.partial(jax.jit, static_argnames=("out_features",))
def _forward_jit(x, wih, whh, b, wfc, bfc, *, out_features):
    B, T, D = x.shape
    H, Gp = whh.shape
    Op = wfc.shape[1]
    f32, bf16 = jnp.float32, jnp.bfloat16

    # ---- Tile selection -----------------------------------------------------
    Bp = _round_up(B, 8)                   # sublane-pad batch
    BT = Bp if Bp <= 128 else 128          # batch tile; "parallel" -> v7x megacore
    Bp = _round_up(Bp, BT)
    NB = Bp // BT

    # Time chunk sized so per-chunk x (bf16, double-buffered by the pipeline)
    # plus the per-chunk f32 projection fit comfortably in scoped VMEM on the
    # smallest-VMEM generation (v7x); cap the in-kernel unroll length.
    budget = 4 * 1024 * 1024
    per_step = BT * (2 * 2 * D + 4 * Gp)
    TC = max(1, min(T, 32, budget // per_step))
    NT = -(-T // TC)
    Tp = NT * TC

    # ---- Wrapper-side layout plumbing (no in-kernel reshape of x) -----------
    xb = jnp.pad(jnp.asarray(x, f32), ((0, Bp - B), (0, 0), (0, 0)))
    xt = jnp.transpose(xb, (1, 0, 2))                           # (T, Bp, D)
    xt = jnp.pad(xt, ((0, Tp - T), (0, 0), (0, 0)))
    x4 = (xt.reshape(NT, TC, NB, BT, D)
            .transpose(0, 2, 1, 3, 4)
            .reshape(NT, NB, TC * BT, D)
            .astype(bf16))

    kernel = functools.partial(_lstm_classifier_kernel, seq_len=T)

    out_p = pl.pallas_call(
        kernel,
        out_shape=jax.ShapeDtypeStruct((NB * BT, Op), f32),
        grid=(NB, NT),
        in_specs=[
            # x: one chunk per grid step, pipelined HBM->VMEM.
            pl.BlockSpec((None, None, TC * BT, D), lambda nb, t: (t, nb, 0, 0)),
            # Weights/biases: same block index every step -> stay VMEM-resident.
            pl.BlockSpec((D, Gp), lambda nb, t: (0, 0)),
            pl.BlockSpec((H, Gp), lambda nb, t: (0, 0)),
            pl.BlockSpec((1, Gp), lambda nb, t: (0, 0)),
            pl.BlockSpec((H, Op), lambda nb, t: (0, 0)),
            pl.BlockSpec((1, Op), lambda nb, t: (0, 0)),
        ],
        out_specs=pl.BlockSpec((BT, Op), lambda nb, t: (nb, 0)),
        scratch_shapes=[
            pltpu.VMEM((BT, H), jnp.float32),   # h carry across time chunks
            pltpu.VMEM((BT, H), jnp.float32),   # c carry across time chunks
        ],
        compiler_params=pltpu.CompilerParams(
            dimension_semantics=("parallel", "arbitrary"),
            vmem_limit_bytes=32 * 1024 * 1024,
        ),
    )(x4, wih, whh, b, wfc, bfc)

    return out_p[:B, :out_features]


def rnn_classifier_forward(x, packed):
    """x: (B, T, input_size) f32 -> logits: (B, output_size) f32."""
    return _forward_jit(x, packed["wih"], packed["whh"], packed["b"],
                        packed["wfc"], packed["bfc"],
                        out_features=packed["out_features"])


def _reference_forward(x, params):
    """Pure-JAX f32 reference matching nn.LSTM(batch_first=True) + Linear."""
    H = params["w_hh"].shape[1]
    B, T, _ = x.shape
    b = params["b_ih"] + params["b_hh"]
    h = jnp.zeros((B, H), jnp.float32)
    c = jnp.zeros((B, H), jnp.float32)
    for t in range(T):
        gates = x[:, t, :] @ params["w_ih"].T + h @ params["w_hh"].T + b
        i = jax.nn.sigmoid(gates[:, 0 * H:1 * H])
        f = jax.nn.sigmoid(gates[:, 1 * H:2 * H])
        g = jnp.tanh(gates[:, 2 * H:3 * H])
        o = jax.nn.sigmoid(gates[:, 3 * H:4 * H])
        c = f * c + i * g
        h = o * jnp.tanh(c)
    return h @ params["w_fc"].T + params["b_fc"]


if __name__ == "__main__":
    # Small shapes consistent with the module: batch=2, seq=8, input=16, hidden=32, classes=4.
    B, T, INPUT, HIDDEN, OUT = 2, 8, 16, 32, 4

    key = jax.random.PRNGKey(0)
    k_x, k_p = jax.random.split(key)
    x = jax.random.normal(k_x, (B, T, INPUT), jnp.float32)
    params = init_params(k_p, INPUT, HIDDEN, OUT)

    packed = prepare_params(params)           # one-time weight repack (cached)
    logits = rnn_classifier_forward(x, packed)
    jax.block_until_ready(logits)

    assert logits.shape == (B, OUT) and logits.dtype == jnp.float32

    # Correctness vs. f32 reference (loose tolerance: bf16 MXU operands).
    ref = _reference_forward(x, params)
    max_err = float(jnp.max(jnp.abs(logits - ref)))
    assert max_err < 7.5e-2, f"max abs err {max_err}"

    print("KERNEL_OK")
</pallas_src>

<mosaic_0001>
module attributes {stable_mosaic.version = 11 : i64} {
  func.func @_lstm_classifier_kernel(%arg0: i32, %arg1: i32, %arg2: memref<1x1x64x16xbf16, #tpu.memory_space<vmem>>, %arg3: memref<16x128xbf16, #tpu.memory_space<vmem>>, %arg4: memref<32x128xbf16, #tpu.memory_space<vmem>>, %arg5: memref<1x128xf32, #tpu.memory_space<vmem>>, %arg6: memref<32x128xbf16, #tpu.memory_space<vmem>>, %arg7: memref<1x128xf32, #tpu.memory_space<vmem>>, %arg8: memref<8x128xf32, #tpu.memory_space<vmem>>, %arg9: memref<8x32xf32, #tpu.memory_space<vmem>>, %arg10: memref<8x32xf32, #tpu.memory_space<vmem>>) attributes {dimension_semantics = [#tpu.dimension_semantics<parallel>, #tpu.dimension_semantics<arbitrary>], iteration_bounds = array<i64: 1, 1>, scalar_prefetch = 0 : i64, scratch_operands = 2 : i64, tpu.core_type = #tpu.core_type<tc>, window_params = [{transform_indices = @transform_0, window_bounds = array<i64: 1, 1, 64, 16>}, {pipeline_mode = #tpu.pipeline_mode<synchronous>, transform_indices = @transform_1, window_bounds = array<i64: 16, 128>}, {pipeline_mode = #tpu.pipeline_mode<synchronous>, transform_indices = @transform_2, window_bounds = array<i64: 32, 128>}, {pipeline_mode = #tpu.pipeline_mode<synchronous>, transform_indices = @transform_3, window_bounds = array<i64: 1, 128>}, {pipeline_mode = #tpu.pipeline_mode<synchronous>, transform_indices = @transform_4, window_bounds = array<i64: 32, 128>}, {pipeline_mode = #tpu.pipeline_mode<synchronous>, transform_indices = @transform_5, window_bounds = array<i64: 1, 128>}, {transform_indices = @transform_6, window_bounds = array<i64: 8, 128>}]} {
    %c0_i32 = arith.constant 0 : i32
    %0 = arith.cmpi eq, %arg1, %c0_i32 : i32
    %1 = arith.extui %0 : i1 to i32
    %c0_i32_0 = arith.constant 0 : i32
    %2 = arith.cmpi ne, %1, %c0_i32_0 : i32
    scf.if %2 {
      %cst_100 = arith.constant 0.000000e+00 : f32
      %298 = vector.broadcast %cst_100 : f32 to vector<8x32xf32>
      %c0_101 = arith.constant 0 : index
      %c0_102 = arith.constant 0 : index
      %299 = vector.load %arg9[%c0_101, %c0_102] : memref<8x32xf32, #tpu.memory_space<vmem>>, vector<8x32xf32>
      tpu.vector_store %arg9[%c0_101, %c0_102], %298 {strides = array<i32>} : memref<8x32xf32, #tpu.memory_space<vmem>>, vector<8x32xf32>,
      %cst_103 = arith.constant 0.000000e+00 : f32
      %300 = vector.broadcast %cst_103 : f32 to vector<8x32xf32>
      %c0_104 = arith.constant 0 : index
      %c0_105 = arith.constant 0 : index
      %301 = vector.load %arg10[%c0_104, %c0_105] : memref<8x32xf32, #tpu.memory_space<vmem>>, vector<8x32xf32>
      tpu.vector_store %arg10[%c0_104, %c0_105], %300 {strides = array<i32>} : memref<8x32xf32, #tpu.memory_space<vmem>>, vector<8x32xf32>,
    } else {
    }
    %c0 = arith.constant 0 : index
    %c0_1 = arith.constant 0 : index
    %c0_2 = arith.constant 0 : index
    %c0_3 = arith.constant 0 : index
    %3 = vector.load %arg2[%c0, %c0_1, %c0_2, %c0_3] : memref<1x1x64x16xbf16, #tpu.memory_space<vmem>>, vector<1x1x64x16xbf16>
    %4 = vector.shape_cast %3 : vector<1x1x64x16xbf16> to vector<64x16xbf16>
    %c0_4 = arith.constant 0 : index
    %c0_5 = arith.constant 0 : index
    %5 = vector.load %arg3[%c0_4, %c0_5] : memref<16x128xbf16, #tpu.memory_space<vmem>>, vector<16x128xbf16>
    %cst = arith.constant dense<0.000000e+00> : vector<64x128xf32>
    %6 = tpu.matmul %4, %5, %cst {dimension_numbers = #tpu.dot_dimension_numbers<[1], [0], [0], [1], [0, 0, 1, 1], [], []>} : vector<64x16xbf16>, vector<16x128xbf16>, vector<64x128xf32> -> vector<64x128xf32>
    %c0_6 = arith.constant 0 : index
    %c0_7 = arith.constant 0 : index
    %7 = vector.load %arg5[%c0_6, %c0_7] : memref<1x128xf32, #tpu.memory_space<vmem>>, vector<1x128xf32>
    %8 = vector.broadcast %7 : vector<1x128xf32> to vector<64x128xf32>
    %9 = arith.addf %6, %8 : vector<64x128xf32>
    %c0_8 = arith.constant 0 : index
    %c0_9 = arith.constant 0 : index
    %10 = vector.load %arg4[%c0_8, %c0_9] : memref<32x128xbf16, #tpu.memory_space<vmem>>, vector<32x128xbf16>
    %c0_10 = arith.constant 0 : index
    %c0_11 = arith.constant 0 : index
    %11 = vector.load %arg9[%c0_10, %c0_11] : memref<8x32xf32, #tpu.memory_space<vmem>>, vector<8x32xf32>
    %c0_12 = arith.constant 0 : index
    %c0_13 = arith.constant 0 : index
    %12 = vector.load %arg10[%c0_12, %c0_13] : memref<8x32xf32, #tpu.memory_space<vmem>>, vector<8x32xf32>
    %13 = vector.extract_strided_slice %9 {offsets = [0, 0], sizes = [8, 128], strides = [1, 1]} : vector<64x128xf32> to vector<8x128xf32>
    %14 = arith.truncf %11 : vector<8x32xf32> to vector<8x32xbf16>
    %cst_14 = arith.constant dense<0.000000e+00> : vector<8x128xf32>
    %15 = tpu.matmul %14, %10, %cst_14 {dimension_numbers = #tpu.dot_dimension_numbers<[1], [0], [0], [1], [0, 0, 1, 1], [], []>} : vector<8x32xbf16>, vector<32x128xbf16>, vector<8x128xf32> -> vector<8x128xf32>
    %16 = arith.addf %13, %15 : vector<8x128xf32>
    %17 = vector.extract_strided_slice %16 {offsets = [0, 0], sizes = [8, 32], strides = [1, 1]} : vector<8x128xf32> to vector<8x32xf32>
    %cst_15 = arith.constant 5.000000e-01 : f32
    %18 = vector.broadcast %cst_15 : f32 to vector<8x32xf32>
    %19 = arith.mulf %18, %17 : vector<8x32xf32>
    %20 = math.tanh %19 : vector<8x32xf32>
    %cst_16 = arith.constant 5.000000e-01 : f32
    %21 = vector.broadcast %cst_16 : f32 to vector<8x32xf32>
    %22 = arith.mulf %21, %20 : vector<8x32xf32>
    %cst_17 = arith.constant 5.000000e-01 : f32
    %23 = vector.broadcast %cst_17 : f32 to vector<8x32xf32>
    %24 = arith.addf %22, %23 : vector<8x32xf32>
    %25 = vector.extract_strided_slice %16 {offsets = [0, 32], sizes = [8, 32], strides = [1, 1]} : vector<8x128xf32> to vector<8x32xf32>
    %cst_18 = arith.constant 5.000000e-01 : f32
    %26 = vector.broadcast %cst_18 : f32 to vector<8x32xf32>
    %27 = arith.mulf %26, %25 : vector<8x32xf32>
    %28 = math.tanh %27 : vector<8x32xf32>
    %cst_19 = arith.constant 5.000000e-01 : f32
    %29 = vector.broadcast %cst_19 : f32 to vector<8x32xf32>
    %30 = arith.mulf %29, %28 : vector<8x32xf32>
    %cst_20 = arith.constant 5.000000e-01 : f32
    %31 = vector.broadcast %cst_20 : f32 to vector<8x32xf32>
    %32 = arith.addf %30, %31 : vector<8x32xf32>
    %33 = vector.extract_strided_slice %16 {offsets = [0, 64], sizes = [8, 32], strides = [1, 1]} : vector<8x128xf32> to vector<8x32xf32>
    %34 = math.tanh %33 : vector<8x32xf32>
    %35 = vector.extract_strided_slice %16 {offsets = [0, 96], sizes = [8, 32], strides = [1, 1]} : vector<8x128xf32> to vector<8x32xf32>
    %cst_21 = arith.constant 5.000000e-01 : f32
    %36 = vector.broadcast %cst_21 : f32 to vector<8x32xf32>
    %37 = arith.mulf %36, %35 : vector<8x32xf32>
    %38 = math.tanh %37 : vector<8x32xf32>
    %cst_22 = arith.constant 5.000000e-01 : f32
    %39 = vector.broadcast %cst_22 : f32 to vector<8x32xf32>
    %40 = arith.mulf %39, %38 : vector<8x32xf32>
    %cst_23 = arith.constant 5.000000e-01 : f32
    %41 = vector.broadcast %cst_23 : f32 to vector<8x32xf32>
    %42 = arith.addf %40, %41 : vector<8x32xf32>
    %43 = arith.mulf %32, %12 : vector<8x32xf32>
    %44 = arith.mulf %24, %34 : vector<8x32xf32>
    %45 = arith.addf %43, %44 : vector<8x32xf32>
    %46 = math.tanh %45 : vector<8x32xf32>
    %47 = arith.mulf %42, %46 : vector<8x32xf32>
    %48 = vector.extract_strided_slice %9 {offsets = [8, 0], sizes = [8, 128], strides = [1, 1]} : vector<64x128xf32> to vector<8x128xf32>
    %49 = arith.truncf %47 : vector<8x32xf32> to vector<8x32xbf16>
    %cst_24 = arith.constant dense<0.000000e+00> : vector<8x128xf32>
    %50 = tpu.matmul %49, %10, %cst_24 {dimension_numbers = #tpu.dot_dimension_numbers<[1], [0], [0], [1], [0, 0, 1, 1], [], []>} : vector<8x32xbf16>, vector<32x128xbf16>, vector<8x128xf32> -> vector<8x128xf32>
    %51 = arith.addf %48, %50 : vector<8x128xf32>
    %52 = vector.extract_strided_slice %51 {offsets = [0, 0], sizes = [8, 32], strides = [1, 1]} : vector<8x128xf32> to vector<8x32xf32>
    %cst_25 = arith.constant 5.000000e-01 : f32
    %53 = vector.broadcast %cst_25 : f32 to vector<8x32xf32>
    %54 = arith.mulf %53, %52 : vector<8x32xf32>
    %55 = math.tanh %54 : vector<8x32xf32>
    %cst_26 = arith.constant 5.000000e-01 : f32
    %56 = vector.broadcast %cst_26 : f32 to vector<8x32xf32>
    %57 = arith.mulf %56, %55 : vector<8x32xf32>
    %cst_27 = arith.constant 5.000000e-01 : f32
    %58 = vector.broadcast %cst_27 : f32 to vector<8x32xf32>
    %59 = arith.addf %57, %58 : vector<8x32xf32>
    %60 = vector.extract_strided_slice %51 {offsets = [0, 32], sizes = [8, 32], strides = [1, 1]} : vector<8x128xf32> to vector<8x32xf32>
    %cst_28 = arith.constant 5.000000e-01 : f32
    %61 = vector.broadcast %cst_28 : f32 to vector<8x32xf32>
    %62 = arith.mulf %61, %60 : vector<8x32xf32>
    %63 = math.tanh %62 : vector<8x32xf32>
    %cst_29 = arith.constant 5.000000e-01 : f32
    %64 = vector.broadcast %cst_29 : f32 to vector<8x32xf32>
    %65 = arith.mulf %64, %63 : vector<8x32xf32>
    %cst_30 = arith.constant 5.000000e-01 : f32
    %66 = vector.broadcast %cst_30 : f32 to vector<8x32xf32>
    %67 = arith.addf %65, %66 : vector<8x32xf32>
    %68 = vector.extract_strided_slice %51 {offsets = [0, 64], sizes = [8, 32], strides = [1, 1]} : vector<8x128xf32> to vector<8x32xf32>
    %69 = math.tanh %68 : vector<8x32xf32>
    %70 = vector.extract_strided_slice %51 {offsets = [0, 96], sizes = [8, 32], strides = [1, 1]} : vector<8x128xf32> to vector<8x32xf32>
    %cst_31 = arith.constant 5.000000e-01 : f32
    %71 = vector.broadcast %cst_31 : f32 to vector<8x32xf32>
    %72 = arith.mulf %71, %70 : vector<8x32xf32>
    %73 = math.tanh %72 : vector<8x32xf32>
    %cst_32 = arith.constant 5.000000e-01 : f32
    %74 = vector.broadcast %cst_32 : f32 to vector<8x32xf32>
    %75 = arith.mulf %74, %73 : vector<8x32xf32>
    %cst_33 = arith.constant 5.000000e-01 : f32
    %76 = vector.broadcast %cst_33 : f32 to vector<8x32xf32>
    %77 = arith.addf %75, %76 : vector<8x32xf32>
    %78 = arith.mulf %67, %45 : vector<8x32xf32>
    %79 = arith.mulf %59, %69 : vector<8x32xf32>
    %80 = arith.addf %78, %79 : vector<8x32xf32>
    %81 = math.tanh %80 : vector<8x32xf32>
    %82 = arith.mulf %77, %81 : vector<8x32xf32>
    %83 = vector.extract_strided_slice %9 {offsets = [16, 0], sizes = [8, 128], strides = [1, 1]} : vector<64x128xf32> to vector<8x128xf32>
    %84 = arith.truncf %82 : vector<8x32xf32> to vector<8x32xbf16>
    %cst_34 = arith.constant dense<0.000000e+00> : vector<8x128xf32>
    %85 = tpu.matmul %84, %10, %cst_34 {dimension_numbers = #tpu.dot_dimension_numbers<[1], [0], [0], [1], [0, 0, 1, 1], [], []>} : vector<8x32xbf16>, vector<32x128xbf16>, vector<8x128xf32> -> vector<8x128xf32>
    %86 = arith.addf %83, %85 : vector<8x128xf32>
    %87 = vector.extract_strided_slice %86 {offsets = [0, 0], sizes = [8, 32], strides = [1, 1]} : vector<8x128xf32> to vector<8x32xf32>
    %cst_35 = arith.constant 5.000000e-01 : f32
    %88 = vector.broadcast %cst_35 : f32 to vector<8x32xf32>
    %89 = arith.mulf %88, %87 : vector<8x32xf32>
    %90 = math.tanh %89 : vector<8x32xf32>
    %cst_36 = arith.constant 5.000000e-01 : f32
    %91 = vector.broadcast %cst_36 : f32 to vector<8x32xf32>
    %92 = arith.mulf %91, %90 : vector<8x32xf32>
    %cst_37 = arith.constant 5.000000e-01 : f32
    %93 = vector.broadcast %cst_37 : f32 to vector<8x32xf32>
    %94 = arith.addf %92, %93 : vector<8x32xf32>
    %95 = vector.extract_strided_slice %86 {offsets = [0, 32], sizes = [8, 32], strides = [1, 1]} : vector<8x128xf32> to vector<8x32xf32>
    %cst_38 = arith.constant 5.000000e-01 : f32
    %96 = vector.broadcast %cst_38 : f32 to vector<8x32xf32>
    %97 = arith.mulf %96, %95 : vector<8x32xf32>
    %98 = math.tanh %97 : vector<8x32xf32>
    %cst_39 = arith.constant 5.000000e-01 : f32
    %99 = vector.broadcast %cst_39 : f32 to vector<8x32xf32>
    %100 = arith.mulf %99, %98 : vector<8x32xf32>
    %cst_40 = arith.constant 5.000000e-01 : f32
    %101 = vector.broadcast %cst_40 : f32 to vector<8x32xf32>
    %102 = arith.addf %100, %101 : vector<8x32xf32>
    %103 = vector.extract_strided_slice %86 {offsets = [0, 64], sizes = [8, 32], strides = [1, 1]} : vector<8x128xf32> to vector<8x32xf32>
    %104 = math.tanh %103 : vector<8x32xf32>
    %105 = vector.extract_strided_slice %86 {offsets = [0, 96], sizes = [8, 32], strides = [1, 1]} : vector<8x128xf32> to vector<8x32xf32>
    %cst_41 = arith.constant 5.000000e-01 : f32
    %106 = vector.broadcast %cst_41 : f32 to vector<8x32xf32>
    %107 = arith.mulf %106, %105 : vector<8x32xf32>
    %108 = math.tanh %107 : vector<8x32xf32>
    %cst_42 = arith.constant 5.000000e-01 : f32
    %109 = vector.broadcast %cst_42 : f32 to vector<8x32xf32>
    %110 = arith.mulf %109, %108 : vector<8x32xf32>
    %cst_43 = arith.constant 5.000000e-01 : f32
    %111 = vector.broadcast %cst_43 : f32 to vector<8x32xf32>
    %112 = arith.addf %110, %111 : vector<8x32xf32>
    %113 = arith.mulf %102, %80 : vector<8x32xf32>
    %114 = arith.mulf %94, %104 : vector<8x32xf32>
    %115 = arith.addf %113, %114 : vector<8x32xf32>
    %116 = math.tanh %115 : vector<8x32xf32>
    %117 = arith.mulf %112, %116 : vector<8x32xf32>
    %118 = vector.extract_strided_slice %9 {offsets = [24, 0], sizes = [8, 128], strides = [1, 1]} : vector<64x128xf32> to vector<8x128xf32>
    %119 = arith.truncf %117 : vector<8x32xf32> to vector<8x32xbf16>
    %cst_44 = arith.constant dense<0.000000e+00> : vector<8x128xf32>
    %120 = tpu.matmul %119, %10, %cst_44 {dimension_numbers = #tpu.dot_dimension_numbers<[1], [0], [0], [1], [0, 0, 1, 1], [], []>} : vector<8x32xbf16>, vector<32x128xbf16>, vector<8x128xf32> -> vector<8x128xf32>
    %121 = arith.addf %118, %120 : vector<8x128xf32>
    %122 = vector.extract_strided_slice %121 {offsets = [0, 0], sizes = [8, 32], strides = [1, 1]} : vector<8x128xf32> to vector<8x32xf32>
    %cst_45 = arith.constant 5.000000e-01 : f32
    %123 = vector.broadcast %cst_45 : f32 to vector<8x32xf32>
    %124 = arith.mulf %123, %122 : vector<8x32xf32>
    %125 = math.tanh %124 : vector<8x32xf32>
    %cst_46 = arith.constant 5.000000e-01 : f32
    %126 = vector.broadcast %cst_46 : f32 to vector<8x32xf32>
    %127 = arith.mulf %126, %125 : vector<8x32xf32>
    %cst_47 = arith.constant 5.000000e-01 : f32
    %128 = vector.broadcast %cst_47 : f32 to vector<8x32xf32>
    %129 = arith.addf %127, %128 : vector<8x32xf32>
    %130 = vector.extract_strided_slice %121 {offsets = [0, 32], sizes = [8, 32], strides = [1, 1]} : vector<8x128xf32> to vector<8x32xf32>
    %cst_48 = arith.constant 5.000000e-01 : f32
    %131 = vector.broadcast %cst_48 : f32 to vector<8x32xf32>
    %132 = arith.mulf %131, %130 : vector<8x32xf32>
    %133 = math.tanh %132 : vector<8x32xf32>
    %cst_49 = arith.constant 5.000000e-01 : f32
    %134 = vector.broadcast %cst_49 : f32 to vector<8x32xf32>
    %135 = arith.mulf %134, %133 : vector<8x32xf32>
    %cst_50 = arith.constant 5.000000e-01 : f32
    %136 = vector.broadcast %cst_50 : f32 to vector<8x32xf32>
    %137 = arith.addf %135, %136 : vector<8x32xf32>
    %138 = vector.extract_strided_slice %121 {offsets = [0, 64], sizes = [8, 32], strides = [1, 1]} : vector<8x128xf32> to vector<8x32xf32>
    %139 = math.tanh %138 : vector<8x32xf32>
    %140 = vector.extract_strided_slice %121 {offsets = [0, 96], sizes = [8, 32], strides = [1, 1]} : vector<8x128xf32> to vector<8x32xf32>
    %cst_51 = arith.constant 5.000000e-01 : f32
    %141 = vector.broadcast %cst_51 : f32 to vector<8x32xf32>
    %142 = arith.mulf %141, %140 : vector<8x32xf32>
    %143 = math.tanh %142 : vector<8x32xf32>
    %cst_52 = arith.constant 5.000000e-01 : f32
    %144 = vector.broadcast %cst_52 : f32 to vector<8x32xf32>
    %145 = arith.mulf %144, %143 : vector<8x32xf32>
    %cst_53 = arith.constant 5.000000e-01 : f32
    %146 = vector.broadcast %cst_53 : f32 to vector<8x32xf32>
    %147 = arith.addf %145, %146 : vector<8x32xf32>
    %148 = arith.mulf %137, %115 : vector<8x32xf32>
    %149 = arith.mulf %129, %139 : vector<8x32xf32>
    %150 = arith.addf %148, %149 : vector<8x32xf32>
    %151 = math.tanh %150 : vector<8x32xf32>
    %152 = arith.mulf %147, %151 : vector<8x32xf32>
    %153 = vector.extract_strided_slice %9 {offsets = [32, 0], sizes = [8, 128], strides = [1, 1]} : vector<64x128xf32> to vector<8x128xf32>
    %154 = arith.truncf %152 : vector<8x32xf32> to vector<8x32xbf16>
    %cst_54 = arith.constant dense<0.000000e+00> : vector<8x128xf32>
    %155 = tpu.matmul %154, %10, %cst_54 {dimension_numbers = #tpu.dot_dimension_numbers<[1], [0], [0], [1], [0, 0, 1, 1], [], []>} : vector<8x32xbf16>, vector<32x128xbf16>, vector<8x128xf32> -> vector<8x128xf32>
    %156 = arith.addf %153, %155 : vector<8x128xf32>
    %157 = vector.extract_strided_slice %156 {offsets = [0, 0], sizes = [8, 32], strides = [1, 1]} : vector<8x128xf32> to vector<8x32xf32>
    %cst_55 = arith.constant 5.000000e-01 : f32
    %158 = vector.broadcast %cst_55 : f32 to vector<8x32xf32>
    %159 = arith.mulf %158, %157 : vector<8x32xf32>
    %160 = math.tanh %159 : vector<8x32xf32>
    %cst_56 = arith.constant 5.000000e-01 : f32
    %161 = vector.broadcast %cst_56 : f32 to vector<8x32xf32>
    %162 = arith.mulf %161, %160 : vector<8x32xf32>
    %cst_57 = arith.constant 5.000000e-01 : f32
    %163 = vector.broadcast %cst_57 : f32 to vector<8x32xf32>
    %164 = arith.addf %162, %163 : vector<8x32xf32>
    %165 = vector.extract_strided_slice %156 {offsets = [0, 32], sizes = [8, 32], strides = [1, 1]} : vector<8x128xf32> to vector<8x32xf32>
    %cst_58 = arith.constant 5.000000e-01 : f32
    %166 = vector.broadcast %cst_58 : f32 to vector<8x32xf32>
    %167 = arith.mulf %166, %165 : vector<8x32xf32>
    %168 = math.tanh %167 : vector<8x32xf32>
    %cst_59 = arith.constant 5.000000e-01 : f32
    %169 = vector.broadcast %cst_59 : f32 to vector<8x32xf32>
    %170 = arith.mulf %169, %168 : vector<8x32xf32>
    %cst_60 = arith.constant 5.000000e-01 : f32
    %171 = vector.broadcast %cst_60 : f32 to vector<8x32xf32>
    %172 = arith.addf %170, %171 : vector<8x32xf32>
    %173 = vector.extract_strided_slice %156 {offsets = [0, 64], sizes = [8, 32], strides = [1, 1]} : vector<8x128xf32> to vector<8x32xf32>
    %174 = math.tanh %173 : vector<8x32xf32>
    %175 = vector.extract_strided_slice %156 {offsets = [0, 96], sizes = [8, 32], strides = [1, 1]} : vector<8x128xf32> to vector<8x32xf32>
    %cst_61 = arith.constant 5.000000e-01 : f32
    %176 = vector.broadcast %cst_61 : f32 to vector<8x32xf32>
    %177 = arith.mulf %176, %175 : vector<8x32xf32>
    %178 = math.tanh %177 : vector<8x32xf32>
    %cst_62 = arith.constant 5.000000e-01 : f32
    %179 = vector.broadcast %cst_62 : f32 to vector<8x32xf32>
    %180 = arith.mulf %179, %178 : vector<8x32xf32>
    %cst_63 = arith.constant 5.000000e-01 : f32
    %181 = vector.broadcast %cst_63 : f32 to vector<8x32xf32>
    %182 = arith.addf %180, %181 : vector<8x32xf32>
    %183 = arith.mulf %172, %150 : vector<8x32xf32>
    %184 = arith.mulf %164, %174 : vector<8x32xf32>
    %185 = arith.addf %183, %184 : vector<8x32xf32>
    %186 = math.tanh %185 : vector<8x32xf32>
    %187 = arith.mulf %182, %186 : vector<8x32xf32>
    %188 = vector.extract_strided_slice %9 {offsets = [40, 0], sizes = [8, 128], strides = [1, 1]} : vector<64x128xf32> to vector<8x128xf32>
    %189 = arith.truncf %187 : vector<8x32xf32> to vector<8x32xbf16>
    %cst_64 = arith.constant dense<0.000000e+00> : vector<8x128xf32>
    %190 = tpu.matmul %189, %10, %cst_64 {dimension_numbers = #tpu.dot_dimension_numbers<[1], [0], [0], [1], [0, 0, 1, 1], [], []>} : vector<8x32xbf16>, vector<32x128xbf16>, vector<8x128xf32> -> vector<8x128xf32>
    %191 = arith.addf %188, %190 : vector<8x128xf32>
    %192 = vector.extract_strided_slice %191 {offsets = [0, 0], sizes = [8, 32], strides = [1, 1]} : vector<8x128xf32> to vector<8x32xf32>
    %cst_65 = arith.constant 5.000000e-01 : f32
    %193 = vector.broadcast %cst_65 : f32 to vector<8x32xf32>
    %194 = arith.mulf %193, %192 : vector<8x32xf32>
    %195 = math.tanh %194 : vector<8x32xf32>
    %cst_66 = arith.constant 5.000000e-01 : f32
    %196 = vector.broadcast %cst_66 : f32 to vector<8x32xf32>
    %197 = arith.mulf %196, %195 : vector<8x32xf32>
    %cst_67 = arith.constant 5.000000e-01 : f32
    %198 = vector.broadcast %cst_67 : f32 to vector<8x32xf32>
    %199 = arith.addf %197, %198 : vector<8x32xf32>
    %200 = vector.extract_strided_slice %191 {offsets = [0, 32], sizes = [8, 32], strides = [1, 1]} : vector<8x128xf32> to vector<8x32xf32>
    %cst_68 = arith.constant 5.000000e-01 : f32
    %201 = vector.broadcast %cst_68 : f32 to vector<8x32xf32>
    %202 = arith.mulf %201, %200 : vector<8x32xf32>
    %203 = math.tanh %202 : vector<8x32xf32>
    %cst_69 = arith.constant 5.000000e-01 : f32
    %204 = vector.broadcast %cst_69 : f32 to vector<8x32xf32>
    %205 = arith.mulf %204, %203 : vector<8x32xf32>
    %cst_70 = arith.constant 5.000000e-01 : f32
    %206 = vector.broadcast %cst_70 : f32 to vector<8x32xf32>
    %207 = arith.addf %205, %206 : vector<8x32xf32>
    %208 = vector.extract_strided_slice %191 {offsets = [0, 64], sizes = [8, 32], strides = [1, 1]} : vector<8x128xf32> to vector<8x32xf32>
    %209 = math.tanh %208 : vector<8x32xf32>
    %210 = vector.extract_strided_slice %191 {offsets = [0, 96], sizes = [8, 32], strides = [1, 1]} : vector<8x128xf32> to vector<8x32xf32>
    %cst_71 = arith.constant 5.000000e-01 : f32
    %211 = vector.broadcast %cst_71 : f32 to vector<8x32xf32>
    %212 = arith.mulf %211, %210 : vector<8x32xf32>
    %213 = math.tanh %212 : vector<8x32xf32>
    %cst_72 = arith.constant 5.000000e-01 : f32
    %214 = vector.broadcast %cst_72 : f32 to vector<8x32xf32>
    %215 = arith.mulf %214, %213 : vector<8x32xf32>
    %cst_73 = arith.constant 5.000000e-01 : f32
    %216 = vector.broadcast %cst_73 : f32 to vector<8x32xf32>
    %217 = arith.addf %215, %216 : vector<8x32xf32>
    %218 = arith.mulf %207, %185 : vector<8x32xf32>
    %219 = arith.mulf %199, %209 : vector<8x32xf32>
    %220 = arith.addf %218, %219 : vector<8x32xf32>
    %221 = math.tanh %220 : vector<8x32xf32>
    %222 = arith.mulf %217, %221 : vector<8x32xf32>
    %223 = vector.extract_strided_slice %9 {offsets = [48, 0], sizes = [8, 128], strides = [1, 1]} : vector<64x128xf32> to vector<8x128xf32>
    %224 = arith.truncf %222 : vector<8x32xf32> to vector<8x32xbf16>
    %cst_74 = arith.constant dense<0.000000e+00> : vector<8x128xf32>
    %225 = tpu.matmul %224, %10, %cst_74 {dimension_numbers = #tpu.dot_dimension_numbers<[1], [0], [0], [1], [0, 0, 1, 1], [], []>} : vector<8x32xbf16>, vector<32x128xbf16>, vector<8x128xf32> -> vector<8x128xf32>
    %226 = arith.addf %223, %225 : vector<8x128xf32>
    %227 = vector.extract_strided_slice %226 {offsets = [0, 0], sizes = [8, 32], strides = [1, 1]} : vector<8x128xf32> to vector<8x32xf32>
    %cst_75 = arith.constant 5.000000e-01 : f32
    %228 = vector.broadcast %cst_75 : f32 to vector<8x32xf32>
    %229 = arith.mulf %228, %227 : vector<8x32xf32>
    %230 = math.tanh %229 : vector<8x32xf32>
    %cst_76 = arith.constant 5.000000e-01 : f32
    %231 = vector.broadcast %cst_76 : f32 to vector<8x32xf32>
    %232 = arith.mulf %231, %230 : vector<8x32xf32>
    %cst_77 = arith.constant 5.000000e-01 : f32
    %233 = vector.broadcast %cst_77 : f32 to vector<8x32xf32>
    %234 = arith.addf %232, %233 : vector<8x32xf32>
    %235 = vector.extract_strided_slice %226 {offsets = [0, 32], sizes = [8, 32], strides = [1, 1]} : vector<8x128xf32> to vector<8x32xf32>
    %cst_78 = arith.constant 5.000000e-01 : f32
    %236 = vector.broadcast %cst_78 : f32 to vector<8x32xf32>
    %237 = arith.mulf %236, %235 : vector<8x32xf32>
    %238 = math.tanh %237 : vector<8x32xf32>
    %cst_79 = arith.constant 5.000000e-01 : f32
    %239 = vector.broadcast %cst_79 : f32 to vector<8x32xf32>
    %240 = arith.mulf %239, %238 : vector<8x32xf32>
    %cst_80 = arith.constant 5.000000e-01 : f32
    %241 = vector.broadcast %cst_80 : f32 to vector<8x32xf32>
    %242 = arith.addf %240, %241 : vector<8x32xf32>
    %243 = vector.extract_strided_slice %226 {offsets = [0, 64], sizes = [8, 32], strides = [1, 1]} : vector<8x128xf32> to vector<8x32xf32>
    %244 = math.tanh %243 : vector<8x32xf32>
    %245 = vector.extract_strided_slice %226 {offsets = [0, 96], sizes = [8, 32], strides = [1, 1]} : vector<8x128xf32> to vector<8x32xf32>
    %cst_81 = arith.constant 5.000000e-01 : f32
    %246 = vector.broadcast %cst_81 : f32 to vector<8x32xf32>
    %247 = arith.mulf %246, %245 : vector<8x32xf32>
    %248 = math.tanh %247 : vector<8x32xf32>
    %cst_82 = arith.constant 5.000000e-01 : f32
    %249 = vector.broadcast %cst_82 : f32 to vector<8x32xf32>
    %250 = arith.mulf %249, %248 : vector<8x32xf32>
    %cst_83 = arith.constant 5.000000e-01 : f32
    %251 = vector.broadcast %cst_83 : f32 to vector<8x32xf32>
    %252 = arith.addf %250, %251 : vector<8x32xf32>
    %253 = arith.mulf %242, %220 : vector<8x32xf32>
    %254 = arith.mulf %234, %244 : vector<8x32xf32>
    %255 = arith.addf %253, %254 : vector<8x32xf32>
    %256 = math.tanh %255 : vector<8x32xf32>
    %257 = arith.mulf %252, %256 : vector<8x32xf32>
    %258 = vector.extract_strided_slice %9 {offsets = [56, 0], sizes = [8, 128], strides = [1, 1]} : vector<64x128xf32> to vector<8x128xf32>
    %259 = arith.truncf %257 : vector<8x32xf32> to vector<8x32xbf16>
    %cst_84 = arith.constant dense<0.000000e+00> : vector<8x128xf32>
    %260 = tpu.matmul %259, %10, %cst_84 {dimension_numbers = #tpu.dot_dimension_numbers<[1], [0], [0], [1], [0, 0, 1, 1], [], []>} : vector<8x32xbf16>, vector<32x128xbf16>, vector<8x128xf32> -> vector<8x128xf32>
    %261 = arith.addf %258, %260 : vector<8x128xf32>
    %262 = vector.extract_strided_slice %261 {offsets = [0, 0], sizes = [8, 32], strides = [1, 1]} : vector<8x128xf32> to vector<8x32xf32>
    %cst_85 = arith.constant 5.000000e-01 : f32
    %263 = vector.broadcast %cst_85 : f32 to vector<8x32xf32>
    %264 = arith.mulf %263, %262 : vector<8x32xf32>
    %265 = math.tanh %264 : vector<8x32xf32>
    %cst_86 = arith.constant 5.000000e-01 : f32
    %266 = vector.broadcast %cst_86 : f32 to vector<8x32xf32>
    %267 = arith.mulf %266, %265 : vector<8x32xf32>
    %cst_87 = arith.constant 5.000000e-01 : f32
    %268 = vector.broadcast %cst_87 : f32 to vector<8x32xf32>
    %269 = arith.addf %267, %268 : vector<8x32xf32>
    %270 = vector.extract_strided_slice %261 {offsets = [0, 32], sizes = [8, 32], strides = [1, 1]} : vector<8x128xf32> to vector<8x32xf32>
    %cst_88 = arith.constant 5.000000e-01 : f32
    %271 = vector.broadcast %cst_88 : f32 to vector<8x32xf32>
    %272 = arith.mulf %271, %270 : vector<8x32xf32>
    %273 = math.tanh %272 : vector<8x32xf32>
    %cst_89 = arith.constant 5.000000e-01 : f32
    %274 = vector.broadcast %cst_89 : f32 to vector<8x32xf32>
    %275 = arith.mulf %274, %273 : vector<8x32xf32>
    %cst_90 = arith.constant 5.000000e-01 : f32
    %276 = vector.broadcast %cst_90 : f32 to vector<8x32xf32>
    %277 = arith.addf %275, %276 : vector<8x32xf32>
    %278 = vector.extract_strided_slice %261 {offsets = [0, 64], sizes = [8, 32], strides = [1, 1]} : vector<8x128xf32> to vector<8x32xf32>
    %279 = math.tanh %278 : vector<8x32xf32>
    %280 = vector.extract_strided_slice %261 {offsets = [0, 96], sizes = [8, 32], strides = [1, 1]} : vector<8x128xf32> to vector<8x32xf32>
    %cst_91 = arith.constant 5.000000e-01 : f32
    %281 = vector.broadcast %cst_91 : f32 to vector<8x32xf32>
    %282 = arith.mulf %281, %280 : vector<8x32xf32>
    %283 = math.tanh %282 : vector<8x32xf32>
    %cst_92 = arith.constant 5.000000e-01 : f32
    %284 = vector.broadcast %cst_92 : f32 to vector<8x32xf32>
    %285 = arith.mulf %284, %283 : vector<8x32xf32>
    %cst_93 = arith.constant 5.000000e-01 : f32
    %286 = vector.broadcast %cst_93 : f32 to vector<8x32xf32>
    %287 = arith.addf %285, %286 : vector<8x32xf32>
    %288 = arith.mulf %277, %255 : vector<8x32xf32>
    %289 = arith.mulf %269, %279 : vector<8x32xf32>
    %290 = arith.addf %288, %289 : vector<8x32xf32>
    %291 = math.tanh %290 : vector<8x32xf32>
    %292 = arith.mulf %287, %291 : vector<8x32xf32>
    %c0_94 = arith.constant 0 : index
    %c0_95 = arith.constant 0 : index
    %293 = vector.load %arg9[%c0_94, %c0_95] : memref<8x32xf32, #tpu.memory_space<vmem>>, vector<8x32xf32>
    tpu.vector_store %arg9[%c0_94, %c0_95], %292 {strides = array<i32>} : memref<8x32xf32, #tpu.memory_space<vmem>>, vector<8x32xf32>,
    %c0_96 = arith.constant 0 : index
    %c0_97 = arith.constant 0 : index
    %294 = vector.load %arg10[%c0_96, %c0_97] : memref<8x32xf32, #tpu.memory_space<vmem>>, vector<8x32xf32>
    tpu.vector_store %arg10[%c0_96, %c0_97], %290 {strides = array<i32>} : memref<8x32xf32, #tpu.memory_space<vmem>>, vector<8x32xf32>,
    %c0_i32_98 = arith.constant 0 : i32
    %295 = arith.cmpi eq, %arg1, %c0_i32_98 : i32
    %296 = arith.extui %295 : i1 to i32
    %c0_i32_99 = arith.constant 0 : i32
    %297 = arith.cmpi ne, %296, %c0_i32_99 : i32
    scf.if %297 {
      %298 = arith.truncf %292 : vector<8x32xf32> to vector<8x32xbf16>
      %c0_100 = arith.constant 0 : index
      %c0_101 = arith.constant 0 : index
      %299 = vector.load %arg6[%c0_100, %c0_101] : memref<32x128xbf16, #tpu.memory_space<vmem>>, vector<32x128xbf16>
      %cst_102 = arith.constant dense<0.000000e+00> : vector<8x128xf32>
      %300 = tpu.matmul %298, %299, %cst_102 {dimension_numbers = #tpu.dot_dimension_numbers<[1], [0], [0], [1], [0, 0, 1, 1], [], []>} : vector<8x32xbf16>, vector<32x128xbf16>, vector<8x128xf32> -> vector<8x128xf32>
      %c0_103 = arith.constant 0 : index
      %c0_104 = arith.constant 0 : index
      %301 = vector.load %arg7[%c0_103, %c0_104] : memref<1x128xf32, #tpu.memory_space<vmem>>, vector<1x128xf32>
      %302 = vector.broadcast %301 : vector<1x128xf32> to vector<8x128xf32>
      %303 = arith.addf %300, %302 : vector<8x128xf32>
      %c0_105 = arith.constant 0 : index
      %c0_106 = arith.constant 0 : index
      %304 = vector.load %arg8[%c0_105, %c0_106] : memref<8x128xf32, #tpu.memory_space<vmem>>, vector<8x128xf32>
      tpu.vector_store %arg8[%c0_105, %c0_106], %303 {strides = array<i32>} : memref<8x128xf32, #tpu.memory_space<vmem>>, vector<8x128xf32>,
    } else {
    }
    return
  }
  func.func @transform_0(%arg0: i32, %arg1: i32) -> (i32, i32, i32, i32) {
    %c0_i32 = arith.constant 0 : i32
    %c0_i32_0 = arith.constant 0 : i32
    %c0_i32_1 = arith.constant 0 : i32
    return %arg1, %arg0, %c0_i32, %c0_i32_0 : i32, i32, i32, i32
  }
  func.func @transform_1(%arg0: i32, %arg1: i32) -> (i32, i32) {
    %c0_i32 = arith.constant 0 : i32
    %c0_i32_0 = arith.constant 0 : i32
    %c0_i32_1 = arith.constant 0 : i32
    return %c0_i32, %c0_i32_0 : i32, i32
  }
  func.func @transform_2(%arg0: i32, %arg1: i32) -> (i32, i32) {
    %c0_i32 = arith.constant 0 : i32
    %c0_i32_0 = arith.constant 0 : i32
    %c0_i32_1 = arith.constant 0 : i32
    return %c0_i32, %c0_i32_0 : i32, i32
  }
  func.func @transform_3(%arg0: i32, %arg1: i32) -> (i32, i32) {
    %c0_i32 = arith.constant 0 : i32
    %c0_i32_0 = arith.constant 0 : i32
    %c0_i32_1 = arith.constant 0 : i32
    return %c0_i32, %c0_i32_0 : i32, i32
  }
  func.func @transform_4(%arg0: i32, %arg1: i32) -> (i32, i32) {
    %c0_i32 = arith.constant 0 : i32
    %c0_i32_0 = arith.constant 0 : i32
    %c0_i32_1 = arith.constant 0 : i32
    return %c0_i32, %c0_i32_0 : i32, i32
  }
  func.func @transform_5(%arg0: i32, %arg1: i32) -> (i32, i32) {
    %c0_i32 = arith.constant 0 : i32
    %c0_i32_0 = arith.constant 0 : i32
    %c0_i32_1 = arith.constant 0 : i32
    return %c0_i32, %c0_i32_0 : i32, i32
  }
  func.func @transform_6(%arg0: i32, %arg1: i32) -> (i32, i32) {
    %c0_i32 = arith.constant 0 : i32
    %c0_i32_0 = arith.constant 0 : i32
    return %arg0, %c0_i32 : i32, i32
  }
}

</mosaic_0001>

<llo_original>
// kernel: _forward_jit.1
$region0: #{_forward_jit.1}
  #allocation0 [shape = 'u32[]', space=smem, size = 0x4, offset = 0x4, fixed_abs, tag = 'smem constant byte address 0x4 - core index']
  #allocation1 [shape = 'u32[72,128]{1,0:T(1,128)}', space=vmem, size = 0x9000, scoped, tag = 'internal scratch']
  #allocation2 [shape = 'f32[8,32]{1,0:T(8,128)}', space=vmem, size = 0x1000, scoped, tag = 'scratch operand']
  #allocation3 [shape = 'f32[8,32]{1,0:T(8,128)}', space=vmem, size = 0x1000, scoped, tag = 'scratch operand']
  %s0 = inlined_call_operand.vmem [shape: bf16[1,1,64,16], index: 0, kind: input, shape index: {}]
  %s1 = inlined_call_operand.vmem [shape: bf16[16,128], index: 1, kind: input, shape index: {}]
  %s2 = inlined_call_operand.vmem [shape: bf16[32,128], index: 2, kind: input, shape index: {}]
  %s3 = inlined_call_operand.vmem [shape: f32[1,128], index: 3, kind: input, shape index: {}]
  %s4 = inlined_call_operand.vmem [shape: bf16[32,128], index: 4, kind: input, shape index: {}]
  %s5 = inlined_call_operand.vmem [shape: f32[1,128], index: 5, kind: input, shape index: {}]
  %s6 = inlined_call_operand.vmem [shape: f32[8,128], index: 6, kind: output, shape index: {}]
  %s7 = sld [smem:[#allocation0]]
  $region42: #{_forward_jit.1} parent=0
    _
  %s9 = ssub.s32 1, %s7
  %s10 = scalar_select 0, %s9, %s7
  // Predicated region
  $region2: #{_forward_jit.1} parent=0 // pred_check
    _
  $region3: #{_forward_jit.1} parent=0 // pred_check_branch
    %12 = sbr.rel (0) target = $region5
  $region4: #{_forward_jit.1} parent=0 // pred_region
    _
  $region5: #{_forward_jit.1} parent=0 // pred_fallthru
    _
  // Predicated region
  $region6: #{_forward_jit.1} parent=0 // pred_check
    _
  $region7: #{_forward_jit.1} parent=0 // pred_check_branch
    %14 = sbr.rel (0) target = $region9
  $region8: #{_forward_jit.1} parent=0 // pred_region
    _
  $region9: #{_forward_jit.1} parent=0 // pred_fallthru
    _
  // Predicated region
  $region10: #{_forward_jit.1} parent=0 // pred_check
    _
  $region11: #{_forward_jit.1} parent=0 // pred_check_branch
    %16 = sbr.rel (0) target = $region13
  $region12: #{_forward_jit.1} parent=0 // pred_region
    _
  $region13: #{_forward_jit.1} parent=0 // pred_fallthru
    _
  // Predicated region
  $region14: #{_forward_jit.1} parent=0 // pred_check
    _
  $region15: #{_forward_jit.1} parent=0 // pred_check_branch
    %18 = sbr.rel (0) target = $region17
  $region16: #{_forward_jit.1} parent=0 // pred_region
    _
  $region17: #{_forward_jit.1} parent=0 // pred_fallthru
    _
  // Predicated region
  $region18: #{_forward_jit.1} parent=0 // pred_check
    _
  $region19: #{_forward_jit.1} parent=0 // pred_check_branch
    %20 = sbr.rel (0) target = $region21
  $region20: #{_forward_jit.1} parent=0 // pred_region
    _
  $region21: #{_forward_jit.1} parent=0 // pred_fallthru
    _
  // Predicated region
  $region22: #{_forward_jit.1} parent=0 // pred_check
    _
  $region23: #{_forward_jit.1} parent=0 // pred_check_branch
    %22 = sbr.rel (0) target = $region25
  $region24: #{_forward_jit.1} parent=0 // pred_region
    _
  $region25: #{_forward_jit.1} parent=0 // pred_fallthru
    _
  %p24 = scmp.eq.s32.totalorder 0, 0
  // Predicated region
  $region26: #{_forward_jit.1} parent=0 // pred_check
    %p25 = pneg %p24
  $region27: #{_forward_jit.1} parent=0 // pred_check_branch
    %27 = sbr.rel (%p25) target = $region29
  $region28: #{_forward_jit.1} parent=0 // pred_region
    %vm28 = vcmask 261120
    %29 = vst.msk [vmem:[#allocation2] sm:$0xff] %vm28, 0.0
    %30 = vst.msk [vmem:[#allocation3] sm:$0xff] %vm28, 0.0
  $region29: #{_forward_jit.1} parent=0 // pred_fallthru
    _
  %v31 = vld [vmem:[%s0] sm:$0xf]
  %v32 = vld [vmem:[%s0 + $0x4] sm:$0xf]
  %v33 = vld [vmem:[%s0 + $0x8] sm:$0xf]
  %v34 = vld [vmem:[%s0 + $0xc] sm:$0xf]
  %v35 = vld [vmem:[%s0 + $0x10] sm:$0xf]
  %v36 = vld [vmem:[%s0 + $0x14] sm:$0xf]
  %v37 = vld [vmem:[%s0 + $0x18] sm:$0xf]
  %v38 = vld [vmem:[%s0 + $0x1c] sm:$0xf]
  %v39 = vld [vmem:[%s1] sm:$0xf]
  %v40 = vld [vmem:[%s1 + $0x4] sm:$0xf]
  %v41 = vld [vmem:[%s3] sm:$0x1]
  %v43 = vperm.slane %v41, 0
  %v53 = vunpack.c.l.b16 %v31
  %v54 = vunpack.c.l.b16 %v32
  %v55 = vunpack.c.l.b16 %v33
  %v56 = vunpack.c.l.b16 %v34
  %v57 = vunpack.c.l.b16 %v35
  %v58 = vunpack.c.l.b16 %v36
  %v59 = vunpack.c.l.b16 %v37
  %v60 = vunpack.c.l.b16 %v38
  %v61 = vpack.c.b16 %v54, %v53
  %v62 = vpack.c.b16 %v56, %v55
  %v63 = vpack.c.b16 %v58, %v57
  %v64 = vpack.c.b16 %v60, %v59
  %v67 = vunpack.c.l.b16 %v39
  %v68 = vunpack.c.l.b16 %v40
  %v69 = vpack.c.b16 %v68, %v67
  %vm71 = vcmask 130048
  %v73 = vsel %vm71, %v61, 0
  %v76 = vsel %vm71, %v62, 0
  %v79 = vsel %vm71, %v63, 0
  %v82 = vsel %vm71, %v64, 0
  %84 = vmatpush.bf16.msra.mxu0 0
  %85 = vmatpush.bf16.msra.mxu0 0
  %86 = vmatpush.bf16.msra.mxu0 0
  %87 = vmatpush.bf16.msra.mxu0 0
  %88 = vmatpush.bf16.msra.mxu0 0
  %89 = vmatpush.bf16.msra.mxu0 0
  %90 = vmatpush.bf16.msra.mxu0 0
  %91 = vmatpush.bf16.msra.mxu0 %v69
  %92 = vmatmul.bf16.gmra.mxu0 %v73
  %v93 = vpop.f32.mrf.mxu0
  %v94 = vadd.f32 %v43, %v93
  %v95 = vpop.f32.mrf.mxu0
  %v96 = vadd.f32 %v43, %v95
  %97 = vmatmul.bf16.gmra.mxu0 %v76
  %v98 = vpop.f32.mrf.mxu0
  %v99 = vadd.f32 %v43, %v98
  %v100 = vpop.f32.mrf.mxu0
  %v101 = vadd.f32 %v43, %v100
  %102 = vmatmul.bf16.gmra.mxu0 %v79
  %v103 = vpop.f32.mrf.mxu0
  %v104 = vadd.f32 %v43, %v103
  %v105 = vpop.f32.mrf.mxu0
  %v106 = vadd.f32 %v43, %v105
  %107 = vmatmul.bf16.gmra.mxu0 %v82
  %v108 = vpop.f32.mrf.mxu0
  %v109 = vadd.f32 %v43, %v108
  %v110 = vpop.f32.mrf.mxu0
  %v111 = vadd.f32 %v43, %v110
  %112 = vdwg.mxu0
  %v113 = vld [vmem:[%s2] sm:$0xf]
  %v114 = vld [vmem:[%s2 + $0x4] sm:$0xf]
  %v115 = vld [vmem:[%s2 + $0x8] sm:$0xf]
  %v116 = vld [vmem:[%s2 + $0xc] sm:$0xf]
  %v117 = vld [vmem:[#allocation2] sm:$0xff]
  %v118 = vld [vmem:[#allocation3] sm:$0xff]
  %v119 = vpack.c.bf16 %v117, %v117
  %v124 = vunpack.c.l.b16 %v113
  %v125 = vunpack.c.l.b16 %v114
  %v126 = vunpack.c.l.b16 %v115
  %v127 = vunpack.c.l.b16 %v116
  %v128 = vpack.c.b16 %v125, %v124
  %v129 = vpack.c.b16 %v127, %v126
  %vm132 = vcmask 261120
  %v134 = vsel %vm132, %v119, 0
  %136 = vmatpush.bf16.msra.mxu0 0
  %137 = vmatpush.bf16.msra.mxu0 0
  %138 = vmatpush.bf16.msra.mxu0 0
  %139 = vmatpush.bf16.msra.mxu0 0
  %140 = vmatpush.bf16.msra.mxu0 0
  %141 = vmatpush.bf16.msra.mxu0 0
  %142 = vmatpush.bf16.msra.mxu0 %v129
  %143 = vmatpush.bf16.msra.mxu0 %v128
  %144 = vmatmul.bf16.gmra.mxu0 %v134
  %v145 = vpop.f32.mrf.mxu0
  %v146 = vadd.f32 0.0, %v145
  %v147 = vpop.f32.mrf.mxu0
  %148 = vdwg.mxu0
  %v149 = vadd.f32 %v94, %v146
  %v150 = vmul.f32 %v149, 0.5
  %v151 = vtanh.pop %v150
  %v152 = vmul.f32 %v151, 0.5
  %v153 = vadd.f32 %v152, 0.5
  %v154 = vtanh.pop %v149
  %156 = vrot.lane.b32.xlu0 %v118, 32
  %v157 = vpop.permute.xlu0 %156
  %v159 = vmul.f32 %v153, %v157
  %161 = vrot.lane.b32.xlu0 %v154, 64
  %v162 = vpop.permute.xlu0 %161
  %v164 = vmul.f32 %v153, %v162
  %166 = vrot.lane.b32.xlu0 %v164, 32
  %v167 = vpop.permute.xlu0 %166
  %v169 = vadd.f32 %v159, %v167
  %v170 = vtanh.pop %v169
  %172 = vrot.lane.b32.xlu0 %v170, 64
  %v173 = vpop.permute.xlu0 %172
  %v175 = vmul.f32 %v153, %v173
  %v176 = vpack.c.bf16 %v175, %v175
  %178 = vrot.lane.b32.xlu0 %v176, 32
  %v179 = vpop.permute.xlu0 %178
  %v181 = vsel %vm132, %v179, 0
  %183 = vmatpush.bf16.msra.mxu0 0
  %184 = vmatpush.bf16.msra.mxu0 0
  %185 = vmatpush.bf16.msra.mxu0 0
  %186 = vmatpush.bf16.msra.mxu0 0
  %187 = vmatpush.bf16.msra.mxu0 0
  %188 = vmatpush.bf16.msra.mxu0 0
  %189 = vmatpush.bf16.msra.mxu0 %v129
  %190 = vmatpush.bf16.msra.mxu0 %v128
  %191 = vmatmul.bf16.gmra.mxu0 %v181
  %v192 = vpop.f32.mrf.mxu0
  %v193 = vadd.f32 0.0, %v192
  %v194 = vpop.f32.mrf.mxu0
  %195 = vdwg.mxu0
  %v196 = vadd.f32 %v96, %v193
  %v197 = vmul.f32 %v196, 0.5
  %v198 = vtanh.pop %v197
  %v199 = vmul.f32 %v198, 0.5
  %v200 = vadd.f32 %v199, 0.5
  %v201 = vtanh.pop %v196
  %v202 = vmul.f32 %v200, %v169
  %204 = vrot.lane.b32.xlu0 %v201, 64
  %v205 = vpop.permute.xlu0 %204
  %v207 = vmul.f32 %v200, %v205
  %209 = vrot.lane.b32.xlu0 %v207, 32
  %v210 = vpop.permute.xlu0 %209
  %v212 = vadd.f32 %v202, %v210
  %v213 = vtanh.pop %v212
  %215 = vrot.lane.b32.xlu0 %v213, 64
  %v216 = vpop.permute.xlu0 %215
  %v218 = vmul.f32 %v200, %v216
  %v219 = vpack.c.bf16 %v218, %v218
  %221 = vrot.lane.b32.xlu0 %v219, 32
  %v222 = vpop.permute.xlu0 %221
  %v224 = vsel %vm132, %v222, 0
  %226 = vmatpush.bf16.msra.mxu0 0
  %227 = vmatpush.bf16.msra.mxu0 0
  %228 = vmatpush.bf16.msra.mxu0 0
  %229 = vmatpush.bf16.msra.mxu0 0
  %230 = vmatpush.bf16.msra.mxu0 0
  %231 = vmatpush.bf16.msra.mxu0 0
  %232 = vmatpush.bf16.msra.mxu0 %v129
  %233 = vmatpush.bf16.msra.mxu0 %v128
  %234 = vmatmul.bf16.gmra.mxu0 %v224
  %v235 = vpop.f32.mrf.mxu0
  %v236 = vadd.f32 0.0, %v235
  %v237 = vpop.f32.mrf.mxu0
  %238 = vdwg.mxu0
  %v239 = vadd.f32 %v99, %v236
  %v240 = vmul.f32 %v239, 0.5
  %v241 = vtanh.pop %v240
  %v242 = vmul.f32 %v241, 0.5
  %v243 = vadd.f32 %v242, 0.5
  %v244 = vtanh.pop %v239
  %v245 = vmul.f32 %v243, %v212
  %247 = vrot.lane.b32.xlu0 %v244, 64
  %v248 = vpop.permute.xlu0 %247
  %v250 = vmul.f32 %v243, %v248
  %252 = vrot.lane.b32.xlu0 %v250, 32
  %v253 = vpop.permute.xlu0 %252
  %v255 = vadd.f32 %v245, %v253
  %v256 = vtanh.pop %v255
  %258 = vrot.lane.b32.xlu0 %v256, 64
  %v259 = vpop.permute.xlu0 %258
  %v261 = vmul.f32 %v243, %v259
  %v262 = vpack.c.bf16 %v261, %v261
  %264 = vrot.lane.b32.xlu0 %v262, 32
  %v265 = vpop.permute.xlu0 %264
  %v267 = vsel %vm132, %v265, 0
  %269 = vmatpush.bf16.msra.mxu0 0
  %270 = vmatpush.bf16.msra.mxu0 0
  %271 = vmatpush.bf16.msra.mxu0 0
  %272 = vmatpush.bf16.msra.mxu0 0
  %273 = vmatpush.bf16.msra.mxu0 0
  %274 = vmatpush.bf16.msra.mxu0 0
  %275 = vmatpush.bf16.msra.mxu0 %v129
  %276 = vmatpush.bf16.msra.mxu0 %v128
  %277 = vmatmul.bf16.gmra.mxu0 %v267
  %v278 = vpop.f32.mrf.mxu0
  %v279 = vadd.f32 0.0, %v278
  %v280 = vpop.f32.mrf.mxu0
  %281 = vdwg.mxu0
  %v282 = vadd.f32 %v101, %v279
  %v283 = vmul.f32 %v282, 0.5
  %v284 = vtanh.pop %v283
  %v285 = vmul.f32 %v284, 0.5
  %v286 = vadd.f32 %v285, 0.5
  %v287 = vtanh.pop %v282
  %v288 = vmul.f32 %v286, %v255
  %290 = vrot.lane.b32.xlu0 %v287, 64
  %v291 = vpop.permute.xlu0 %290
  %v293 = vmul.f32 %v286, %v291
  %295 = vrot.lane.b32.xlu0 %v293, 32
  %v296 = vpop.permute.xlu0 %295
  %v298 = vadd.f32 %v288, %v296
  %v299 = vtanh.pop %v298
  %301 = vrot.lane.b32.xlu0 %v299, 64
  %v302 = vpop.permute.xlu0 %301
  %v304 = vmul.f32 %v286, %v302
  %v305 = vpack.c.bf16 %v304, %v304
  %307 = vrot.lane.b32.xlu0 %v305, 32
  %v308 = vpop.permute.xlu0 %307
  %v310 = vsel %vm132, %v308, 0
  %312 = vmatpush.bf16.msra.mxu0 0
  %313 = vmatpush.bf16.msra.mxu0 0
  %314 = vmatpush.bf16.msra.mxu0 0
  %315 = vmatpush.bf16.msra.mxu0 0
  %316 = vmatpush.bf16.msra.mxu0 0
  %317 = vmatpush.bf16.msra.mxu0 0
  %318 = vmatpush.bf16.msra.mxu0 %v129
  %319 = vmatpush.bf16.msra.mxu0 %v128
  %320 = vmatmul.bf16.gmra.mxu0 %v310
  %v321 = vpop.f32.mrf.mxu0
  %v322 = vadd.f32 0.0, %v321
  %v323 = vpop.f32.mrf.mxu0
  %324 = vdwg.mxu0
  %v325 = vadd.f32 %v104, %v322
  %v326 = vmul.f32 %v325, 0.5
  %v327 = vtanh.pop %v326
  %v328 = vmul.f32 %v327, 0.5
  %v329 = vadd.f32 %v328, 0.5
  %v330 = vtanh.pop %v325
  %v331 = vmul.f32 %v329, %v298
  %333 = vrot.lane.b32.xlu0 %v330, 64
  %v334 = vpop.permute.xlu0 %333
  %v336 = vmul.f32 %v329, %v334
  %338 = vrot.lane.b32.xlu0 %v336, 32
  %v339 = vpop.permute.xlu0 %338
  %v341 = vadd.f32 %v331, %v339
  %v342 = vtanh.pop %v341
  %344 = vrot.lane.b32.xlu0 %v342, 64
  %v345 = vpop.permute.xlu0 %344
  %v347 = vmul.f32 %v329, %v345
  %v348 = vpack.c.bf16 %v347, %v347
  %350 = vrot.lane.b32.xlu0 %v348, 32
  %v351 = vpop.permute.xlu0 %350
  %v353 = vsel %vm132, %v351, 0
  %355 = vmatpush.bf16.msra.mxu0 0
  %356 = vmatpush.bf16.msra.mxu0 0
  %357 = vmatpush.bf16.msra.mxu0 0
  %358 = vmatpush.bf16.msra.mxu0 0
  %359 = vmatpush.bf16.msra.mxu0 0
  %360 = vmatpush.bf16.msra.mxu0 0
  %361 = vmatpush.bf16.msra.mxu0 %v129
  %362 = vmatpush.bf16.msra.mxu0 %v128
  %363 = vmatmul.bf16.gmra.mxu0 %v353
  %v364 = vpop.f32.mrf.mxu0
  %v365 = vadd.f32 0.0, %v364
  %v366 = vpop.f32.mrf.mxu0
  %367 = vdwg.mxu0
  %v368 = vadd.f32 %v106, %v365
  %v369 = vmul.f32 %v368, 0.5
  %v370 = vtanh.pop %v369
  %v371 = vmul.f32 %v370, 0.5
  %v372 = vadd.f32 %v371, 0.5
  %v373 = vtanh.pop %v368
  %v374 = vmul.f32 %v372, %v341
  %376 = vrot.lane.b32.xlu0 %v373, 64
  %v377 = vpop.permute.xlu0 %376
  %v379 = vmul.f32 %v372, %v377
  %381 = vrot.lane.b32.xlu0 %v379, 32
  %v382 = vpop.permute.xlu0 %381
  %v384 = vadd.f32 %v374, %v382
  %v385 = vtanh.pop %v384
  %387 = vrot.lane.b32.xlu0 %v385, 64
  %v388 = vpop.permute.xlu0 %387
  %v390 = vmul.f32 %v372, %v388
  %v391 = vpack.c.bf16 %v390, %v390
  %393 = vrot.lane.b32.xlu0 %v391, 32
  %v394 = vpop.permute.xlu0 %393
  %v396 = vsel %vm132, %v394, 0
  %398 = vmatpush.bf16.msra.mxu0 0
  %399 = vmatpush.bf16.msra.mxu0 0
  %400 = vmatpush.bf16.msra.mxu0 0
  %401 = vmatpush.bf16.msra.mxu0 0
  %402 = vmatpush.bf16.msra.mxu0 0
  %403 = vmatpush.bf16.msra.mxu0 0
  %404 = vmatpush.bf16.msra.mxu0 %v129
  %405 = vmatpush.bf16.msra.mxu0 %v128
  %406 = vmatmul.bf16.gmra.mxu0 %v396
  %v407 = vpop.f32.mrf.mxu0
  %v408 = vadd.f32 0.0, %v407
  %v409 = vpop.f32.mrf.mxu0
  %410 = vdwg.mxu0
  %v411 = vadd.f32 %v109, %v408
  %v412 = vmul.f32 %v411, 0.5
  %v413 = vtanh.pop %v412
  %v414 = vmul.f32 %v413, 0.5
  %v415 = vadd.f32 %v414, 0.5
  %v416 = vtanh.pop %v411
  %v417 = vmul.f32 %v415, %v384
  %419 = vrot.lane.b32.xlu0 %v416, 64
  %v420 = vpop.permute.xlu0 %419
  %v422 = vmul.f32 %v415, %v420
  %424 = vrot.lane.b32.xlu0 %v422, 32
  %v425 = vpop.permute.xlu0 %424
  %v427 = vadd.f32 %v417, %v425
  %v428 = vtanh.pop %v427
  %430 = vrot.lane.b32.xlu0 %v428, 64
  %v431 = vpop.permute.xlu0 %430
  %v433 = vmul.f32 %v415, %v431
  %v434 = vpack.c.bf16 %v433, %v433
  %436 = vrot.lane.b32.xlu0 %v434, 32
  %v437 = vpop.permute.xlu0 %436
  %v439 = vsel %vm132, %v437, 0
  %441 = vmatpush.bf16.msra.mxu0 0
  %442 = vmatpush.bf16.msra.mxu0 0
  %443 = vmatpush.bf16.msra.mxu0 0
  %444 = vmatpush.bf16.msra.mxu0 0
  %445 = vmatpush.bf16.msra.mxu0 0
  %446 = vmatpush.bf16.msra.mxu0 0
  %447 = vmatpush.bf16.msra.mxu0 %v129
  %448 = vmatpush.bf16.msra.mxu0 %v128
  %449 = vmatmul.bf16.gmra.mxu0 %v439
  %v450 = vpop.f32.mrf.mxu0
  %v451 = vadd.f32 0.0, %v450
  %v452 = vpop.f32.mrf.mxu0
  %453 = vdwg.mxu0
  %v454 = vadd.f32 %v111, %v451
  %v455 = vmul.f32 %v454, 0.5
  %v456 = vtanh.pop %v455
  %v457 = vmul.f32 %v456, 0.5
  %v458 = vadd.f32 %v457, 0.5
  %v459 = vtanh.pop %v454
  %v460 = vmul.f32 %v458, %v427
  %462 = vrot.lane.b32.xlu0 %v459, 64
  %v463 = vpop.permute.xlu0 %462
  %v465 = vmul.f32 %v458, %v463
  %467 = vrot.lane.b32.xlu0 %v465, 32
  %v468 = vpop.permute.xlu0 %467
  %v470 = vadd.f32 %v460, %v468
  %v471 = vtanh.pop %v470
  %473 = vrot.lane.b32.xlu0 %v471, 64
  %v474 = vpop.permute.xlu0 %473
  %v476 = vmul.f32 %v458, %v474
  %478 = vrot.lane.b32.xlu0 %v476, 32
  %v479 = vpop.permute.xlu0 %478
  %481 = vst.msk [vmem:[#allocation2] sm:$0xff] %vm132, %v479
  %483 = vrot.lane.b32.xlu0 %v470, 96
  %v484 = vpop.permute.xlu0 %483
  %486 = vst.msk [vmem:[#allocation3] sm:$0xff] %vm132, %v484
  // Predicated region
  $region30: #{_forward_jit.1} parent=0 // pred_check
    %p487 = pneg %p24
  $region31: #{_forward_jit.1} parent=0 // pred_check_branch
    %489 = sbr.rel (%p487) target = $region33
  $region32: #{_forward_jit.1} parent=0 // pred_region
    %v490 = vpack.c.bf16 %v476, %v476
    %v491 = vld [vmem:[%s4] sm:$0xf]
    %v492 = vld [vmem:[%s4 + $0x4] sm:$0xf]
    %v493 = vld [vmem:[%s4 + $0x8] sm:$0xf]
    %v494 = vld [vmem:[%s4 + $0xc] sm:$0xf]
    %v495 = vld [vmem:[%s5] sm:$0x1]
    %v497 = vperm.slane %v495, 0
    %500 = vrot.lane.b32.xlu0 %v490, 32
    %v501 = vpop.permute.xlu0 %500
    %v506 = vunpack.c.l.b16 %v491
    %v507 = vunpack.c.l.b16 %v492
    %v508 = vunpack.c.l.b16 %v493
    %v509 = vunpack.c.l.b16 %v494
    %v510 = vpack.c.b16 %v507, %v506
    %v511 = vpack.c.b16 %v509, %v508
    %v515 = vsel %vm132, %v501, 0
    %517 = vmatpush.bf16.msra.mxu0 0
    %518 = vmatpush.bf16.msra.mxu0 0
    %519 = vmatpush.bf16.msra.mxu0 0
    %520 = vmatpush.bf16.msra.mxu0 0
    %521 = vmatpush.bf16.msra.mxu0 0
    %522 = vmatpush.bf16.msra.mxu0 0
    %523 = vmatpush.bf16.msra.mxu0 %v511
    %524 = vmatpush.bf16.msra.mxu0 %v510
    %525 = vmatmul.bf16.gmra.mxu0 %v515
    %v526 = vpop.f32.mrf.mxu0
    %v527 = vadd.f32 %v497, %v526
    %v528 = vpop.f32.mrf.mxu0
    %529 = vdwg.mxu0
    %530 = vst [vmem:[%s6] sm:$0xff] %v527
  $region33: #{_forward_jit.1} parent=0 // pred_fallthru
    _
  // Predicated region
  $region34: #{_forward_jit.1} parent=0 // pred_check
    _
  $region35: #{_forward_jit.1} parent=0 // pred_check_branch
    %532 = sbr.rel (0) target = $region37
  $region36: #{_forward_jit.1} parent=0 // pred_region
    _
  $region37: #{_forward_jit.1} parent=0 // pred_fallthru
    _
  // Predicated region
  $region38: #{_forward_jit.1} parent=0 // pred_check
    _
  $region39: #{_forward_jit.1} parent=0 // pred_check_branch
    %534 = sbr.rel (0) target = $region41
  $region40: #{_forward_jit.1} parent=0 // pred_region
    _
  $region41: #{_forward_jit.1} parent=0 // pred_fallthru
    _

</llo_original>
